<compile_context>
chip_gen: v7x
topology: tpu7x:2x2x1
jax: 0.10.0
libtpu: 0.0.40
codegen_flags: <defaults>
</compile_context>

<pallas_src>
import numpy as np
import jax
import jax.numpy as jnp
from jax.experimental import pallas as pl
from jax.experimental.pallas import tpu as pltpu


def validate_gene_ids(gene_ids: np.ndarray) -> None:
    """Exact port of GenePredictor.__init__ assertions."""
    assert gene_ids.ndim == 1, (
        "gene_ids should be 1D, but got shape: {}".format(gene_ids.shape))
    assert len(np.unique(gene_ids)) == len(gene_ids), (
        "gene_ids should be unique, but got {} non-unique elements".format(
            len(gene_ids) - len(np.unique(gene_ids))))
    assert max(gene_ids) == len(gene_ids) - 1, (
        "gene_ids should be 0-indexed and continuous in range "
        "[0, len(gene_ids) - 1], but got max(gene_ids) = {}".format(
            np.max(gene_ids)))


def _gene_predictor_kernel(emb_ref,   # (TB, K)  bf16 embedding tile
                           w_ref,     # (K, TN)  bf16 weight tile
                           add_ref,   # (TB, TN) f32  bias + gene_bias[gene_ids]
                           out_ref):  # (TB, TN) f32  output tile
    y = jnp.dot(emb_ref[...], w_ref[...], preferred_element_type=jnp.float32)
    out_ref[...] = (y + add_ref[...]).astype(out_ref.dtype)


def gene_predictor_forward(embedding, gene_ids, W, bias, gene_bias,
                           *, tb=None, tn=None):
    """embedding: [B, K] f32, gene_ids: [B] int, W: [K, N] f32,
    bias: [1, N] f32, gene_bias: [G, N] f32 -> [B, N] f32."""
    B, K = embedding.shape
    Kw, N = W.shape
    assert K == Kw
    G = gene_bias.shape[0]

    # Tile sizes: TB multiple of 8 (sublane), TN multiple of 128 (lane).
    if tb is None:
        tb = min(256, B)
    if tn is None:
        tn = min(512, N)
    assert B % tb == 0 and tb % 8 == 0, (B, tb)
    assert N % tn == 0 and tn % 128 == 0, (N, tn)

    # Clamp ids (correctness guard) and hoist the gather + bias add to XLA:
    # a single lane-dense [B, N] stream instead of B tiny per-row DMAs.
    gene_ids = jnp.clip(gene_ids.astype(jnp.int32), 0, G - 1)
    add = (gene_bias[gene_ids] + bias).astype(jnp.float32)          # [B, N]

    # bf16 HBM stream for the matmul operands; accumulate in f32 on the MXU.
    emb_bf16 = embedding.astype(jnp.bfloat16)
    w_bf16 = W.astype(jnp.bfloat16)

    # Grid: N-tiles outer, B-tiles inner => W block index changes least often,
    # so the resident (K, TN) weight tile is reused across all batch tiles.
    grid = (N // tn, B // tb)

    # VMEM budget: double-buffered inputs + output; keep within v7x's 64 MiB.
    vmem_bytes = 2 * (tb * K * 2 + K * tn * 2 + tb * tn * 4 + tb * tn * 4)
    vmem_bytes = min(max(vmem_bytes + (2 << 20), 4 << 20), 48 << 20)

    cost = pl.CostEstimate(
        flops=2 * B * K * N,
        transcendentals=0,
        bytes_accessed=2 * B * K + 2 * K * N + 4 * B * N + 4 * B * N)

    return pl.pallas_call(
        _gene_predictor_kernel,
        out_shape=jax.ShapeDtypeStruct((B, N), jnp.float32),
        grid_spec=pltpu.PrefetchScalarGridSpec(
            num_scalar_prefetch=0,
            grid=grid,
            in_specs=[
                pl.BlockSpec((tb, K), lambda n, b: (b, 0)),    # embedding
                pl.BlockSpec((K, tn), lambda n, b: (0, n)),    # weight tile
                pl.BlockSpec((tb, tn), lambda n, b: (b, n)),   # bias+gene_bias
            ],
            out_specs=pl.BlockSpec((tb, tn), lambda n, b: (b, n)),
        ),
        compiler_params=pltpu.CompilerParams(
            dimension_semantics=("parallel", "parallel"),
            vmem_limit_bytes=vmem_bytes),
        cost_estimate=cost,
    )(emb_bf16, w_bf16, add)


if __name__ == "__main__":
    # Small deterministic shapes consistent with the module's interface.
    bottleneck = 128    # K (padded toward 128 per MXU guidance)
    n_cells = 512       # N (multiple of 128 -> lane-dense stores)
    n_genes = 16        # G
    batch = 16          # B
    TB, TN = 8, 256     # exercises a (2, 2) grid

    # gene_ids as required by __init__: unique, 0-indexed, continuous.
    all_gene_ids_np = np.arange(n_genes, dtype=np.int32)
    validate_gene_ids(all_gene_ids_np)

    key = jax.random.PRNGKey(0)
    k_emb, k_w, k_b, k_gb, k_gid = jax.random.split(key, 5)

    embedding = jax.random.normal(k_emb, (batch, bottleneck), dtype=jnp.float32)
    W = jax.random.normal(k_w, (bottleneck, n_cells), dtype=jnp.float32) * 0.05
    bias = jax.random.normal(k_b, (1, n_cells), dtype=jnp.float32) * 0.01
    gene_bias = jax.random.normal(k_gb, (n_genes, n_cells), dtype=jnp.float32) * 0.1
    gene_ids = jax.random.randint(k_gid, (batch,), 0, n_genes, dtype=jnp.int32)

    out = gene_predictor_forward(embedding, gene_ids, W, bias, gene_bias,
                                 tb=TB, tn=TN)
    out = jax.block_until_ready(out)

    # Pure-JAX reference (same bf16 rounding of matmul operands, f32 accum).
    emb_r = embedding.astype(jnp.bfloat16).astype(jnp.float32)
    w_r = W.astype(jnp.bfloat16).astype(jnp.float32)
    ref = jnp.dot(emb_r, w_r, preferred_element_type=jnp.float32) \
        + bias + gene_bias[gene_ids]

    assert out.shape == (batch, n_cells)
    np.testing.assert_allclose(np.asarray(out), np.asarray(ref),
                               rtol=1e-4, atol=1e-4)

    print("KERNEL_OK")
</pallas_src>

<mosaic_0001>
module attributes {stable_mosaic.version = 11 : i64} {
  func.func @_gene_predictor_kernel(%arg0: i32, %arg1: i32, %arg2: memref<8x128xbf16, #tpu.memory_space<vmem>>, %arg3: memref<128x256xbf16, #tpu.memory_space<vmem>>, %arg4: memref<8x256xf32, #tpu.memory_space<vmem>>, %arg5: memref<8x256xf32, #tpu.memory_space<vmem>>) attributes {dimension_semantics = [#tpu.dimension_semantics<parallel>, #tpu.dimension_semantics<parallel>], iteration_bounds = array<i64: 2, 2>, scalar_prefetch = 0 : i64, scratch_operands = 0 : i64, tpu.core_type = #tpu.core_type<tc>, window_params = [{transform_indices = @transform_0, window_bounds = array<i64: 8, 128>}, {transform_indices = @transform_1, window_bounds = array<i64: 128, 256>}, {transform_indices = @transform_2, window_bounds = array<i64: 8, 256>}, {transform_indices = @transform_3, window_bounds = array<i64: 8, 256>}]} {
    %c0 = arith.constant 0 : index
    %c0_0 = arith.constant 0 : index
    %0 = vector.load %arg2[%c0, %c0_0] : memref<8x128xbf16, #tpu.memory_space<vmem>>, vector<8x128xbf16>
    %c0_1 = arith.constant 0 : index
    %c0_2 = arith.constant 0 : index
    %1 = vector.load %arg3[%c0_1, %c0_2] : memref<128x256xbf16, #tpu.memory_space<vmem>>, vector<128x256xbf16>
    %cst = arith.constant dense<0.000000e+00> : vector<8x256xf32>
    %2 = tpu.matmul %0, %1, %cst {dimension_numbers = #tpu.dot_dimension_numbers<[1], [0], [0], [1], [0, 0, 1, 1], [], []>} : vector<8x128xbf16>, vector<128x256xbf16>, vector<8x256xf32> -> vector<8x256xf32>
    %c0_3 = arith.constant 0 : index
    %c0_4 = arith.constant 0 : index
    %3 = vector.load %arg4[%c0_3, %c0_4] : memref<8x256xf32, #tpu.memory_space<vmem>>, vector<8x256xf32>
    %4 = arith.addf %2, %3 : vector<8x256xf32>
    %c0_5 = arith.constant 0 : index
    %c0_6 = arith.constant 0 : index
    %5 = vector.load %arg5[%c0_5, %c0_6] : memref<8x256xf32, #tpu.memory_space<vmem>>, vector<8x256xf32>
    tpu.vector_store %arg5[%c0_5, %c0_6], %4 {strides = array<i32>} : memref<8x256xf32, #tpu.memory_space<vmem>>, vector<8x256xf32>,
    return
  }
  func.func @transform_0(%arg0: i32, %arg1: i32) -> (i32, i32) {
    %c0_i32 = arith.constant 0 : i32
    %c0_i32_0 = arith.constant 0 : i32
    return %arg1, %c0_i32 : i32, i32
  }
  func.func @transform_1(%arg0: i32, %arg1: i32) -> (i32, i32) {
    %c0_i32 = arith.constant 0 : i32
    %c0_i32_0 = arith.constant 0 : i32
    return %c0_i32, %arg0 : i32, i32
  }
  func.func @transform_2(%arg0: i32, %arg1: i32) -> (i32, i32) {
    %c0_i32 = arith.constant 0 : i32
    return %arg1, %arg0 : i32, i32
  }
  func.func @transform_3(%arg0: i32, %arg1: i32) -> (i32, i32) {
    %c0_i32 = arith.constant 0 : i32
    return %arg1, %arg0 : i32, i32
  }
}

</mosaic_0001>

<llo_original>
// kernel: tpu_custom_call.1
$region0: #{tpu_custom_call.1}
  #allocation0 [shape = 'u32[]', space=smem, size = 0x4, offset = 0x4, fixed_abs, tag = 'smem constant byte address 0x4 - core index']
  #allocation1 [shape = 'u32[144,128]{1,0:T(1,128)}', space=vmem, size = 0x12000, scoped, tag = 'internal scratch']
  %s0 = inlined_call_operand.hbm [shape: bf16[16,128], index: 0, kind: input, shape index: {}]
  %s1 = inlined_call_operand.hbm [shape: bf16[128,512], index: 1, kind: input, shape index: {}]
  %s2 = inlined_call_operand.hbm [shape: f32[16,512], index: 2, kind: input, shape index: {}]
  %s3 = inlined_call_operand.hbm [shape: f32[16,512], index: 3, kind: output, shape index: {}]
  %s4 = sld [smem:[#allocation0]]
  $region57: #{tpu_custom_call.1} parent=0
    _
  %s6 = ssub.s32 1, %s4
  %s7 = scalar_select 0, %s6, %s4
  $region1: #{tpu_custom_call.1} parent=0
    #allocation2 [shape = 'u8[4096]{0}', space=vmem, size = 0x1000, scoped, tag = 'input window, operand 0']
    #allocation3 [shape = 's32[2]{0}', space=sflag, size = 0x8, scoped, tag = 'scoped memory for tpu_custom_call.1']
    #allocation4 [shape = 's32[2]{0}', space=sflag, size = 0x8, scoped, tag = 'scoped memory for tpu_custom_call.1']
    #allocation5 [shape = 'u8[131072]{0}', space=vmem, size = 0x20000, scoped, tag = 'input window, operand 1']
    #allocation6 [shape = 's32[2]{0}', space=sflag, size = 0x8, scoped, tag = 'scoped memory for tpu_custom_call.1']
    #allocation7 [shape = 'u8[16384]{0}', space=vmem, size = 0x4000, scoped, tag = 'input window, operand 2']
    #allocation8 [shape = 'u8[16384]{0}', space=vmem, size = 0x4000, scoped, tag = 'output window, operand 0']
    %8 = vsyncpa [#allocation3], 0
    %s9 = scalar_lea.sflag [#allocation3], 1
    %10 = vsyncpa %s9, 0
    %11 = vsyncpa [#allocation6], 0
    %s12 = scalar_lea.sflag [#allocation6], 1
    %13 = vsyncpa %s12, 0
    %14 = vsyncpa [#allocation4], 0
    %s15 = scalar_lea.sflag [#allocation4], 1
    %16 = vsyncpa %s15, 0
    loop: start=0, step=1, limit=6
    $region2: #{tpu_custom_call.1} parent=1 // loop_pre_header
      _
    $region3: #{tpu_custom_call.1} parent=1 // loop_header
      %s18 = sphi 0, %s22
      %p19 = scmp.ge.s32.totalorder %s18, 6
      %s25 = sphi 0, %s37
      %s26 = sphi 0, %s33
      %s27 = sphi 0, %s25
      %s28 = sphi 0, %s26
      %s29 = sphi 0, %s27
      %s30 = sphi 0, %s28
      %s40 = sphi 0, %s42
      %s43 = sphi 0, %s40
      %s44 = sphi 0, %s43
      %s60 = sphi 0, %s44
      %s66 = sphi 0, %s68
      %s69 = sphi 0, %s66
      %s70 = sphi 0, %s69
      %s86 = sphi 0, %s70
      %s94 = sphi 0, %s96
      %s97 = sphi 0, %s94
      %s98 = sphi 0, %s97
      %s114 = sphi 0, %s98
      %s122 = sphi 0, %s124
      %s125 = sphi 0, %s122
      %s126 = sphi 0, %s125
      %s142 = sphi 0, %s126
    $region4: #{tpu_custom_call.1} parent=1 // loop_header_branch
      %21 = sbr.rel (%p19) target = $region8
    $region5: #{tpu_custom_call.1} parent=1 // loop_body
      %s23 = ssub.s32 %s18, 1
      %s24 = ssub.s32 %s18, 2
      %s31 = sadd.s32 1, %s26
      %p32 = scmp.ge.s32.totalorder %s31, 2
      %s33 = scalar_select %p32, 0, %s31
      %s34 = sadd.s32 1, %s25
      %s35 = scalar_select %p32, %s34, %s25
      %p36 = scmp.ge.s32.totalorder %s35, 2
      %s37 = scalar_select %p36, 0, %s35
      %s38 = ssub.s32 %s26, %s33
      %p39 = scmp.eq.s32.totalorder %s38, 0
      %s41 = sadd.s32 %s40, 1
      %s42 = scalar_select %p39, %s40, %s41
      %p45 = pneg %p39
      %p46 = scmp.eq.s32.totalorder %s18, 3
      %p47 = por %p45, %p46
      %p48 = scmp.ne.s32.totalorder %s40, %s43
      %p49 = scmp.eq.s32.totalorder %s18, 0
      %p50 = por %p48, %p49
      %p51 = scmp.ne.s32.totalorder %s40, %s43
      %p52 = scmp.eq.s32.totalorder %s23, 3
      %p53 = por %p51, %p52
      %p54 = scmp.ne.s32.totalorder %s43, %s44
      %p55 = scmp.eq.s32.totalorder %s23, 0
      %p56 = por %p54, %p55
      %p57 = scmp.ne.s32.totalorder %s43, %s44
      %p58 = scmp.eq.s32.totalorder %s24, 3
      %p59 = por %p57, %p58
      %p61 = scmp.ne.s32.totalorder %s44, %s60
      %p62 = scmp.eq.s32.totalorder %s24, 0
      %p63 = por %p61, %p62
      %s64 = ssub.s32 %s25, %s37
      %p65 = scmp.eq.s32.totalorder %s64, 0
      %s67 = sadd.s32 %s66, 1
      %s68 = scalar_select %p65, %s66, %s67
      %p71 = pneg %p65
      %p72 = scmp.eq.s32.totalorder %s18, 3
      %p73 = por %p71, %p72
      %p74 = scmp.ne.s32.totalorder %s66, %s69
      %p75 = scmp.eq.s32.totalorder %s18, 0
      %p76 = por %p74, %p75
      %p77 = scmp.ne.s32.totalorder %s66, %s69
      %p78 = scmp.eq.s32.totalorder %s23, 3
      %p79 = por %p77, %p78
      %p80 = scmp.ne.s32.totalorder %s69, %s70
      %p81 = scmp.eq.s32.totalorder %s23, 0
      %p82 = por %p80, %p81
      %p83 = scmp.ne.s32.totalorder %s69, %s70
      %p84 = scmp.eq.s32.totalorder %s24, 3
      %p85 = por %p83, %p84
      %p87 = scmp.ne.s32.totalorder %s70, %s86
      %p88 = scmp.eq.s32.totalorder %s24, 0
      %p89 = por %p87, %p88
      %s90 = ssub.s32 %s26, %s33
      %s91 = ssub.s32 %s25, %s37
      %s92 = sor.u32 %s90, %s91
      %p93 = scmp.eq.s32.totalorder %s92, 0
      %s95 = sadd.s32 %s94, 1
      %s96 = scalar_select %p93, %s94, %s95
      %p99 = pneg %p93
      %p100 = scmp.eq.s32.totalorder %s18, 3
      %p101 = por %p99, %p100
      %p102 = scmp.ne.s32.totalorder %s94, %s97
      %p103 = scmp.eq.s32.totalorder %s18, 0
      %p104 = por %p102, %p103
      %p105 = scmp.ne.s32.totalorder %s94, %s97
      %p106 = scmp.eq.s32.totalorder %s23, 3
      %p107 = por %p105, %p106
      %p108 = scmp.ne.s32.totalorder %s97, %s98
      %p109 = scmp.eq.s32.totalorder %s23, 0
      %p110 = por %p108, %p109
      %p111 = scmp.ne.s32.totalorder %s97, %s98
      %p112 = scmp.eq.s32.totalorder %s24, 3
      %p113 = por %p111, %p112
      %p115 = scmp.ne.s32.totalorder %s98, %s114
      %p116 = scmp.eq.s32.totalorder %s24, 0
      %p117 = por %p115, %p116
      %s118 = ssub.s32 %s26, %s33
      %s119 = ssub.s32 %s25, %s37
      %s120 = sor.u32 %s118, %s119
      %p121 = scmp.eq.s32.totalorder %s120, 0
      %s123 = sadd.s32 %s122, 1
      %s124 = scalar_select %p121, %s122, %s123
      %p127 = pneg %p121
      %p128 = scmp.eq.s32.totalorder %s18, 3
      %p129 = por %p127, %p128
      %p130 = scmp.ne.s32.totalorder %s122, %s125
      %p131 = scmp.eq.s32.totalorder %s18, 0
      %p132 = por %p130, %p131
      %p133 = scmp.ne.s32.totalorder %s122, %s125
      %p134 = scmp.eq.s32.totalorder %s23, 3
      %p135 = por %p133, %p134
      %p136 = scmp.ne.s32.totalorder %s125, %s126
      %p137 = scmp.eq.s32.totalorder %s23, 0
      %p138 = por %p136, %p137
      %p139 = scmp.ne.s32.totalorder %s125, %s126
      %p140 = scmp.eq.s32.totalorder %s24, 3
      %p141 = por %p139, %p140
      %p143 = scmp.ne.s32.totalorder %s126, %s142
      %p144 = scmp.eq.s32.totalorder %s24, 0
      %p145 = por %p143, %p144
      %p146 = scmp.le.s32.totalorder 1, %s18
      %p147 = scmp.lt.s32.totalorder %s18, 5
      %p148 = pnand %p146, %p147
      %p149 = pneg %p148
      // Predicated region
      $region9: #{tpu_custom_call.1} parent=5 // pred_check
        _
      $region10: #{tpu_custom_call.1} parent=5 // pred_check_branch
        %151 = sbr.rel (%p148) target = $region12
      $region11: #{tpu_custom_call.1} parent=5 // pred_region
        %s152 = ssub.s32 %s18, 1
      $region12: #{tpu_custom_call.1} parent=5 // pred_fallthru
        _
      %p153 = scmp.lt.s32.totalorder %s18, 4
      // Predicated region
      $region13: #{tpu_custom_call.1} parent=5 // pred_check
        %p154 = pneg %p153
      $region14: #{tpu_custom_call.1} parent=5 // pred_check_branch
        %156 = sbr.rel (%p154) target = $region16
      $region15: #{tpu_custom_call.1} parent=5 // pred_region
        // Predicated region
        $region17: #{tpu_custom_call.1} parent=15 // pred_check
          %p157 = pneg %p50
        $region18: #{tpu_custom_call.1} parent=15 // pred_check_branch
          %159 = sbr.rel (%p157) target = $region20
        $region19: #{tpu_custom_call.1} parent=15 // pred_region
          %s160 = sand.u32 %s40, 1
          %s161 = scalar_lea.sflag [#allocation3], %s160
          %s162 = sand.u32 %s40, 1
          %s163 = smul.addr %s162, 4
          %s164 = scalar_lea.vmem [#allocation2], %s163
          %s166 = ssub.s32 64, 64
          %167 = vsyncadd %s161, %s166
          %s168 = smul.addr %s26, 64
          %s169 = scalar_lea.hbm %s0, %s168
          %s171 = sshll.u32 %s164, 4
          %s172 = int_to_ptr.vmem [resolvable:$true] %s171
          %174 = dma.hbm_to_vmem [thread:$0]  %s169, 64, %s172, %s161
        $region20: #{tpu_custom_call.1} parent=15 // pred_fallthru
          _
        // Predicated region
        $region21: #{tpu_custom_call.1} parent=15 // pred_check
          %p175 = pneg %p76
        $region22: #{tpu_custom_call.1} parent=15 // pred_check_branch
          %177 = sbr.rel (%p175) target = $region24
        $region23: #{tpu_custom_call.1} parent=15 // pred_region
          %s178 = sand.u32 %s18, 1
          %s179 = scalar_lea.sflag [#allocation6], %s178
          %s180 = sand.u32 %s66, 1
          %s181 = smul.addr %s180, 128
          %s182 = scalar_lea.vmem [#allocation5], %s181
          %s183 = smul.u32 2, %s25
          %s185 = ssub.s32 2048, 2048
          %186 = vsyncadd %s179, %s185
          %s187 = smul.addr %s183, 64
          %s188 = scalar_lea.hbm %s1, %s187
          %s189 = sshll.u32 %s182, 4
          %s190 = int_to_ptr.vmem [resolvable:$true] %s189
          %195 = dma.hbm_to_vmem [thread:$0]  %s188, 2048, %s190, %s179, 256, 128, 8
        $region24: #{tpu_custom_call.1} parent=15 // pred_fallthru
          _
        // Predicated region
        $region25: #{tpu_custom_call.1} parent=15 // pred_check
          %p196 = pneg %p104
        $region26: #{tpu_custom_call.1} parent=15 // pred_check_branch
          %198 = sbr.rel (%p196) target = $region28
        $region27: #{tpu_custom_call.1} parent=15 // pred_region
          %s199 = sand.u32 %s18, 1
          %s200 = scalar_lea.sflag [#allocation6], %s199
          %s201 = sand.u32 %s94, 1
          %s202 = smul.addr %s201, 16
          %s203 = scalar_lea.vmem [#allocation7], %s202
          %s204 = smul.u32 2, %s25
          %s206 = ssub.s32 256, 256
          %207 = vsyncadd %s200, %s206
          %s208 = smul.addr %s26, 4
          %s209 = sadd.s32 %s204, %s208
          %s210 = smul.addr %s209, 128
          %s211 = scalar_lea.hbm %s2, %s210
          %s213 = sshll.u32 %s203, 4
          %s214 = int_to_ptr.vmem [resolvable:$true] %s213
          %216 = dma.hbm_to_vmem [thread:$0]  %s211, 256, %s214, %s200
        $region28: #{tpu_custom_call.1} parent=15 // pred_fallthru
          _
      $region16: #{tpu_custom_call.1} parent=5 // pred_fallthru
        _
      %p217 = scmp.le.s32.totalorder 1, %s18
      %p218 = scmp.lt.s32.totalorder %s18, 5
      %p219 = pnand %p217, %p218
      %p220 = pneg %p219
      // Predicated region
      $region29: #{tpu_custom_call.1} parent=5 // pred_check
        _
      $region30: #{tpu_custom_call.1} parent=5 // pred_check_branch
        %222 = sbr.rel (%p219) target = $region32
      $region31: #{tpu_custom_call.1} parent=5 // pred_region
        %s223 = ssub.s32 %s18, 1
        %s224 = sand.u32 %s43, 1
        %s225 = scalar_lea.sflag [#allocation3], %s224
        %s226 = sand.u32 %s43, 1
        %s227 = smul.addr %s226, 4
        %s228 = scalar_lea.vmem [#allocation2], %s227
        // Predicated region
        $region33: #{tpu_custom_call.1} parent=31 // pred_check
          %p229 = pneg %p56
        $region34: #{tpu_custom_call.1} parent=31 // pred_check_branch
          %231 = sbr.rel (%p229) target = $region36
        $region35: #{tpu_custom_call.1} parent=31 // pred_region
          %232 = dma.done %s225, 64
        $region36: #{tpu_custom_call.1} parent=31 // pred_fallthru
          _
        %s233 = sand.u32 %s23, 1
        %s234 = scalar_lea.sflag [#allocation6], %s233
        %s235 = sand.u32 %s69, 1
        %s236 = smul.addr %s235, 128
        %s237 = scalar_lea.vmem [#allocation5], %s236
        // Predicated region
        $region37: #{tpu_custom_call.1} parent=31 // pred_check
          %p238 = pneg %p82
        $region38: #{tpu_custom_call.1} parent=31 // pred_check_branch
          %240 = sbr.rel (%p238) target = $region40
        $region39: #{tpu_custom_call.1} parent=31 // pred_region
          %241 = dma.done %s234, 2048
        $region40: #{tpu_custom_call.1} parent=31 // pred_fallthru
          _
        %s242 = sand.u32 %s23, 1
        %s243 = scalar_lea.sflag [#allocation6], %s242
        %s244 = sand.u32 %s97, 1
        %s245 = smul.addr %s244, 16
        %s246 = scalar_lea.vmem [#allocation7], %s245
        // Predicated region
        $region41: #{tpu_custom_call.1} parent=31 // pred_check
          %p247 = pneg %p110
        $region42: #{tpu_custom_call.1} parent=31 // pred_check_branch
          %249 = sbr.rel (%p247) target = $region44
        $region43: #{tpu_custom_call.1} parent=31 // pred_region
          %250 = dma.done %s243, 256
        $region44: #{tpu_custom_call.1} parent=31 // pred_fallthru
          _
        %s251 = sand.u32 %s43, 1
        %s252 = scalar_lea.sflag [#allocation3], %s251
        %s253 = sand.u32 %s43, 1
        %s254 = smul.addr %s253, 4
        %s255 = scalar_lea.vmem [#allocation2], %s254
        %p256 = pneg %p56
        %p257 = pneg %p53
        %s258 = sand.u32 %s23, 1
        %s259 = scalar_lea.sflag [#allocation6], %s258
        %s260 = sand.u32 %s69, 1
        %s261 = smul.addr %s260, 128
        %s262 = scalar_lea.vmem [#allocation5], %s261
        %p263 = pneg %p82
        %p264 = pneg %p79
        %s265 = sand.u32 %s23, 1
        %s266 = scalar_lea.sflag [#allocation6], %s265
        %s267 = sand.u32 %s97, 1
        %s268 = smul.addr %s267, 16
        %s269 = scalar_lea.vmem [#allocation7], %s268
        %p270 = pneg %p110
        %p271 = pneg %p107
        %p272 = pneg %p138
        %p273 = pneg %p135
        %s274 = sand.u32 %s125, 1
        %s275 = scalar_lea.sflag [#allocation4], %s274
        %s276 = sand.u32 %s125, 1
        %s277 = smul.addr %s276, 16
        %s278 = scalar_lea.vmem [#allocation8], %s277
        %s279 = smul.u32 2, %s27
        %s280 = smul.u32 2, %s27
        %s281 = smul.u32 2, %s27
        %v283 = vld [vmem:[%s228] sm:$0xf]
        %v284 = vld [vmem:[%s237] sm:$0xff]
        %v285 = vld [vmem:[%s237 + $0x8] sm:$0xff]
        %v286 = vld [vmem:[%s237 + $0x10] sm:$0xff]
        %v287 = vld [vmem:[%s237 + $0x18] sm:$0xff]
        %v288 = vld [vmem:[%s237 + $0x20] sm:$0xff]
        %v289 = vld [vmem:[%s237 + $0x28] sm:$0xff]
        %v290 = vld [vmem:[%s237 + $0x30] sm:$0xff]
        %v291 = vld [vmem:[%s237 + $0x38] sm:$0xff]
        %v292 = vld [vmem:[%s237 + $0x40] sm:$0xff]
        %v293 = vld [vmem:[%s237 + $0x48] sm:$0xff]
        %v294 = vld [vmem:[%s237 + $0x50] sm:$0xff]
        %v295 = vld [vmem:[%s237 + $0x58] sm:$0xff]
        %v296 = vld [vmem:[%s237 + $0x60] sm:$0xff]
        %v297 = vld [vmem:[%s237 + $0x68] sm:$0xff]
        %v298 = vld [vmem:[%s237 + $0x70] sm:$0xff]
        %v299 = vld [vmem:[%s237 + $0x78] sm:$0xff]
        %v300 = vld [vmem:[%s246] sm:$0xff]
        %v301 = vld [vmem:[%s246 + $0x8] sm:$0xff]
        %v318 = vunpack.c.l.b16 %v284
        %v319 = vunpack.c.h.b16 %v284
        %v320 = vunpack.c.l.b16 %v285
        %v321 = vunpack.c.h.b16 %v285
        %v322 = vunpack.c.l.b16 %v286
        %v323 = vunpack.c.h.b16 %v286
        %v324 = vunpack.c.l.b16 %v287
        %v325 = vunpack.c.h.b16 %v287
        %v326 = vunpack.c.l.b16 %v288
        %v327 = vunpack.c.h.b16 %v288
        %v328 = vunpack.c.l.b16 %v289
        %v329 = vunpack.c.h.b16 %v289
        %v330 = vunpack.c.l.b16 %v290
        %v331 = vunpack.c.h.b16 %v290
        %v332 = vunpack.c.l.b16 %v291
        %v333 = vunpack.c.h.b16 %v291
        %v334 = vunpack.c.l.b16 %v292
        %v335 = vunpack.c.h.b16 %v292
        %v336 = vunpack.c.l.b16 %v293
        %v337 = vunpack.c.h.b16 %v293
        %v338 = vunpack.c.l.b16 %v294
        %v339 = vunpack.c.h.b16 %v294
        %v340 = vunpack.c.l.b16 %v295
        %v341 = vunpack.c.h.b16 %v295
        %v342 = vunpack.c.l.b16 %v296
        %v343 = vunpack.c.h.b16 %v296
        %v344 = vunpack.c.l.b16 %v297
        %v345 = vunpack.c.h.b16 %v297
        %v346 = vunpack.c.l.b16 %v298
        %v347 = vunpack.c.h.b16 %v298
        %v348 = vunpack.c.l.b16 %v299
        %v349 = vunpack.c.h.b16 %v299
        %v350 = vpack.c.b16 %v320, %v318
        %v351 = vpack.c.b16 %v321, %v319
        %v352 = vpack.c.b16 %v324, %v322
        %v353 = vpack.c.b16 %v325, %v323
        %v354 = vpack.c.b16 %v328, %v326
        %v355 = vpack.c.b16 %v329, %v327
        %v356 = vpack.c.b16 %v332, %v330
        %v357 = vpack.c.b16 %v333, %v331
        %v358 = vpack.c.b16 %v336, %v334
        %v359 = vpack.c.b16 %v337, %v335
        %v360 = vpack.c.b16 %v340, %v338
        %v361 = vpack.c.b16 %v341, %v339
        %v362 = vpack.c.b16 %v344, %v342
        %v363 = vpack.c.b16 %v345, %v343
        %v364 = vpack.c.b16 %v348, %v346
        %v365 = vpack.c.b16 %v349, %v347
        %382 = vmatprep.subr.bf16.mxu0 %v351
        %383 = vmatpush1.bf16.msra.mxu0 %v350
        %384 = vmatprep.subr.bf16.mxu0 %v353
        %385 = vmatpush1.bf16.msra.mxu0 %v352
        %386 = vmatprep.subr.bf16.mxu0 %v355
        %387 = vmatpush1.bf16.msra.mxu0 %v354
        %388 = vmatprep.subr.bf16.mxu0 %v357
        %389 = vmatpush1.bf16.msra.mxu0 %v356
        %390 = vmatprep.subr.bf16.mxu0 %v359
        %391 = vmatpush1.bf16.msra.mxu0 %v358
        %392 = vmatprep.subr.bf16.mxu0 %v361
        %393 = vmatpush1.bf16.msra.mxu0 %v360
        %394 = vmatprep.subr.bf16.mxu0 %v363
        %395 = vmatpush1.bf16.msra.mxu0 %v362
        %396 = vmatprep.subr.bf16.mxu0 %v365
        %397 = vmatpush1.bf16.msra.mxu0 %v364
        %398 = vmatprep.subr.bf16.mxu0 0
        %399 = vmatpush1.bf16.msra.mxu0 0
        %400 = vmatprep.subr.bf16.mxu0 0
        %401 = vmatpush1.bf16.msra.mxu0 0
        %402 = vmatprep.subr.bf16.mxu0 0
        %403 = vmatpush1.bf16.msra.mxu0 0
        %404 = vmatprep.subr.bf16.mxu0 0
        %405 = vmatpush1.bf16.msra.mxu0 0
        %406 = vmatprep.subr.bf16.mxu0 0
        %407 = vmatpush1.bf16.msra.mxu0 0
        %408 = vmatprep.subr.bf16.mxu0 0
        %409 = vmatpush1.bf16.msra.mxu0 0
        %410 = vmatprep.subr.bf16.mxu0 0
        %411 = vmatpush1.bf16.msra.mxu0 0
        %412 = vmatprep.subr.bf16.mxu0 0
        %413 = vmatpush1.bf16.msra.mxu0 0
        %414 = vmatprep.mubr.bf16.mxu0 0
        %415 = vmatmul.mubr.bf16.gmra.mrb[0].mxu0 %v283
        %v416 = vpop.f32.mrb[0].mxu0
        %v417 = vadd.f32 %v300, %v416
        %v418 = vpop.f32.mrb[0].mxu0
        %v419 = vadd.f32 %v301, %v418
        %v420 = vpop.f32.mrb[0].mxu0
        %v421 = vpop.f32.mrb[0].mxu0
        %422 = vdwg.mxu0
        %423 = vst [vmem:[%s278] sm:$0xff] %v417
        %424 = vst [vmem:[%s278 + $0x8] sm:$0xff] %v419
        %s425 = sand.u32 %s125, 1
        %s426 = scalar_lea.sflag [#allocation4], %s425
        %s427 = sand.u32 %s125, 1
        %s428 = smul.addr %s427, 16
        %s429 = scalar_lea.vmem [#allocation8], %s428
        // Predicated region
        $region45: #{tpu_custom_call.1} parent=31 // pred_check
          %p430 = pneg %p135
        $region46: #{tpu_custom_call.1} parent=31 // pred_check_branch
          %432 = sbr.rel (%p430) target = $region48
        $region47: #{tpu_custom_call.1} parent=31 // pred_region
          %s433 = smul.u32 2, %s27
          %s435 = ssub.s32 256, 256
          %436 = vsyncadd %s426, %s435
          %s437 = smul.addr %s28, 4
          %s438 = sadd.s32 %s433, %s437
          %s439 = smul.addr %s438, 128
          %s440 = scalar_lea.hbm %s3, %s439
          %s442 = sshll.u32 %s429, 4
          %s443 = int_to_ptr.vmem [resolvable:$true] %s442
          %445 = dma.vmem_to_hbm [thread:$0]  %s443, 256, %s440, %s426
        $region48: #{tpu_custom_call.1} parent=31 // pred_fallthru
          _
      $region32: #{tpu_custom_call.1} parent=5 // pred_fallthru
        _
      %p446 = scmp.le.s32.totalorder 2, %s18
      // Predicated region
      $region49: #{tpu_custom_call.1} parent=5 // pred_check
        %p447 = pneg %p446
      $region50: #{tpu_custom_call.1} parent=5 // pred_check_branch
        %449 = sbr.rel (%p447) target = $region52
      $region51: #{tpu_custom_call.1} parent=5 // pred_region
        %s450 = ssub.s32 %s18, 2
        // Predicated region
        $region53: #{tpu_custom_call.1} parent=51 // pred_check
          %p451 = pneg %p141
        $region54: #{tpu_custom_call.1} parent=51 // pred_check_branch
          %453 = sbr.rel (%p451) target = $region56
        $region55: #{tpu_custom_call.1} parent=51 // pred_region
          %s454 = sand.u32 %s126, 1
          %s455 = scalar_lea.sflag [#allocation4], %s454
          %s456 = sand.u32 %s126, 1
          %s457 = smul.addr %s456, 16
          %s458 = scalar_lea.vmem [#allocation8], %s457
          %459 = dma.done %s455, 256
        $region56: #{tpu_custom_call.1} parent=51 // pred_fallthru
          _
      $region52: #{tpu_custom_call.1} parent=5 // pred_fallthru
        _
    $region6: #{tpu_custom_call.1} parent=1 // loop_footer
      %s22 = sadd.s32 1, %s18
    $region7: #{tpu_custom_call.1} parent=1 // loop_footer_branch
      %17 = sbr.rel target = $region3
    $region8: #{tpu_custom_call.1} parent=1 // loop_exit
      _
    %460 = vsyncpa [#allocation3], 1
    %s461 = scalar_lea.sflag [#allocation3], 1
    %462 = vsyncpa %s461, 1
    %463 = vsyncpa [#allocation6], 1
    %s464 = scalar_lea.sflag [#allocation6], 1
    %465 = vsyncpa %s464, 1
    %466 = vsyncpa [#allocation4], 1
    %s467 = scalar_lea.sflag [#allocation4], 1
    %468 = vsyncpa %s467, 1

</llo_original>
